<compile_context>
chip_gen: v5e
topology: v5e:2x2
jax: 0.10.0
libtpu: 0.0.40
codegen_flags: <defaults>
</compile_context>

<pallas_src>
import functools

import jax
import jax.numpy as jnp
from jax.experimental import pallas as pl
from jax.experimental.pallas import tpu as pltpu

D_FEATURE = 3
D_MODEL = 256


def _linear_kernel(x_ref, w_ref, b_ref, o_ref):
    # x_ref: (tm, 3)   w_ref: (3, 256)   b_ref: (1, 256)   o_ref: (tm, 256)
    # K=3 matmul on the MXU; Mosaic pads K internally. Accumulate in f32,
    # add bias, cast once on the final store (VALU filler under the output DMA).
    acc = jnp.dot(x_ref[...], w_ref[...], preferred_element_type=jnp.float32)
    o_ref[...] = (acc + b_ref[...]).astype(o_ref.dtype)


def _round_up(x, m):
    return ((x + m - 1) // m) * m


@functools.partial(jax.jit, static_argnames=("tm", "out_dtype", "min_grid_steps"))
def position2embedding_pallas(position, w_t, b, *, tm=4096,
                              out_dtype=jnp.float32, min_grid_steps=4):
    """position: (..., 3) float32; w_t: (3, 256); b: (256,).

    Returns (..., 256) in `out_dtype`. Default f32 matches nn.Linear exactly;
    pass out_dtype=jnp.bfloat16 to halve the dominant HBM write stream (~1.8x)
    when the consumer tolerates it (accumulation stays f32 in-kernel).
    """
    orig_shape = position.shape
    assert orig_shape[-1] == D_FEATURE
    x = position.reshape(-1, D_FEATURE).astype(jnp.float32)
    n = x.shape[0]

    out_itemsize = jnp.dtype(out_dtype).itemsize
    # Min second-minor tile: 8 for f32, 16 for bf16, 32 for int8/fp8.
    sublane = max(8, 32 // out_itemsize)

    # Row tile: as large as `tm`, but keep >= `min_grid_steps` grid steps when the
    # problem allows so the "parallel" axis shards across both TensorCores on v7x
    # (no-op cost on single-TC v5e/v6e: only kicks in for n <= min_grid_steps*tm).
    tm_eff = min(tm, max(sublane, _round_up(pl.cdiv(n, min_grid_steps), sublane)))
    grid_m = pl.cdiv(n, tm_eff)

    # VMEM budget (double-buffered). The (tm,3) f32 x block is lane-padded to 128
    # lanes -> tm*512 B per buffer; out block is tm*256*itemsize. Weights/bias pad
    # to 8 sublanes. Add ~4 MiB slack for Mosaic internal scratch instead of pinning
    # at any generation's physical VMEM size.
    x_block_bytes = tm_eff * 128 * 4
    out_block_bytes = tm_eff * D_MODEL * out_itemsize
    const_bytes = 2 * (8 * D_MODEL * 4)          # w (3->8 sublanes) + bias (1->8 sublanes)
    vmem_limit = 2 * (x_block_bytes + out_block_bytes + const_bytes) + (4 << 20)

    cost = pl.CostEstimate(
        flops=2 * D_FEATURE * D_MODEL * n,
        bytes_accessed=n * (D_FEATURE * 4 + D_MODEL * out_itemsize)
        + D_FEATURE * D_MODEL * 4 + D_MODEL * 4,
        transcendentals=0,
    )

    b2 = b.reshape(1, D_MODEL)

    out = pl.pallas_call(
        _linear_kernel,
        out_shape=jax.ShapeDtypeStruct((n, D_MODEL), out_dtype),
        grid_spec=pltpu.PrefetchScalarGridSpec(
            num_scalar_prefetch=0,
            grid=(grid_m,),
            in_specs=[
                # x tile: full (tiny) feature dim, tiled over rows; last block clipped.
                pl.BlockSpec((tm_eff, D_FEATURE), lambda i: (i, 0)),
                # weight: whole (3, 256) matrix, VMEM-resident every step.
                pl.BlockSpec((D_FEATURE, D_MODEL), lambda i: (0, 0)),
                # bias: whole (1, 256) row, VMEM-resident every step.
                pl.BlockSpec((1, D_MODEL), lambda i: (0, 0)),
            ],
            out_specs=pl.BlockSpec((tm_eff, D_MODEL), lambda i: (i, 0)),
        ),
        compiler_params=pltpu.CompilerParams(
            dimension_semantics=("parallel",),
            vmem_limit_bytes=vmem_limit,
        ),
        cost_estimate=cost,
    )(x, w_t, b2)

    return out.reshape(*orig_shape[:-1], D_MODEL)


def init_params(key):
    """Deterministic init matching nn.Linear(d_feature, d_model) conventions
    (uniform in [-1/sqrt(fan_in), 1/sqrt(fan_in)])."""
    kw, kb = jax.random.split(key)
    bound = 1.0 / (D_FEATURE ** 0.5)
    # torch stores weight as (d_model, d_feature); keep the transpose for x @ W^T.
    w = jax.random.uniform(kw, (D_MODEL, D_FEATURE), jnp.float32, -bound, bound)
    b = jax.random.uniform(kb, (D_MODEL,), jnp.float32, -bound, bound)
    return w.T, b  # (3, 256), (256,)


if __name__ == "__main__":
    key = jax.random.PRNGKey(0)
    k_param, k_in1, k_in2 = jax.random.split(key, 3)

    w_t, b = init_params(k_param)

    # Small example matching the module: batch=2, seq=8, d_feature=3.
    position = jax.random.normal(k_in1, (2, 8, D_FEATURE), jnp.float32)
    out = position2embedding_pallas(position, w_t, b)
    jax.block_until_ready(out)

    ref = (position.reshape(-1, D_FEATURE) @ w_t + b).reshape(2, 8, D_MODEL)
    assert out.shape == (2, 8, D_MODEL)
    assert jnp.allclose(out, ref, atol=1e-5, rtol=1e-5)

    # Multi-step grid with a clipped partial last block (n=1200, tm_eff=304, grid=4).
    position2 = jax.random.normal(k_in2, (4, 300, D_FEATURE), jnp.float32)
    out2 = position2embedding_pallas(position2, w_t, b)
    jax.block_until_ready(out2)

    ref2 = (position2.reshape(-1, D_FEATURE) @ w_t + b).reshape(4, 300, D_MODEL)
    assert out2.shape == (4, 300, D_MODEL)
    assert jnp.allclose(out2, ref2, atol=1e-5, rtol=1e-5)

    # bf16-output path (dtype-aware sublane clamp -> (16,128) min tile respected);
    # f32 accumulation, only the final cast loses precision.
    out_bf16 = position2embedding_pallas(position, w_t, b, out_dtype=jnp.bfloat16)
    jax.block_until_ready(out_bf16)
    assert out_bf16.dtype == jnp.bfloat16
    assert jnp.allclose(out_bf16.astype(jnp.float32), ref, atol=2e-2, rtol=2e-2)

    print("KERNEL_OK")
</pallas_src>

<mosaic_0001>
module attributes {stable_mosaic.version = 11 : i64} {
  func.func @_linear_kernel(%arg0: i32, %arg1: memref<8x3xf32, #tpu.memory_space<vmem>>, %arg2: memref<3x256xf32, #tpu.memory_space<vmem>>, %arg3: memref<1x256xf32, #tpu.memory_space<vmem>>, %arg4: memref<8x256xf32, #tpu.memory_space<vmem>>) attributes {dimension_semantics = [#tpu.dimension_semantics<parallel>], iteration_bounds = array<i64: 2>, scalar_prefetch = 0 : i64, scratch_operands = 0 : i64, tpu.core_type = #tpu.core_type<tc>, window_params = [{transform_indices = @transform_0, window_bounds = array<i64: 8, 3>}, {pipeline_mode = #tpu.pipeline_mode<synchronous>, transform_indices = @transform_1, window_bounds = array<i64: 3, 256>}, {pipeline_mode = #tpu.pipeline_mode<synchronous>, transform_indices = @transform_2, window_bounds = array<i64: 1, 256>}, {transform_indices = @transform_3, window_bounds = array<i64: 8, 256>}]} {
    %c0 = arith.constant 0 : index
    %c0_0 = arith.constant 0 : index
    %0 = vector.load %arg1[%c0, %c0_0] : memref<8x3xf32, #tpu.memory_space<vmem>>, vector<8x3xf32>
    %c0_1 = arith.constant 0 : index
    %c0_2 = arith.constant 0 : index
    %1 = vector.load %arg2[%c0_1, %c0_2] : memref<3x256xf32, #tpu.memory_space<vmem>>, vector<3x256xf32>
    %cst = arith.constant dense<0.000000e+00> : vector<8x256xf32>
    %2 = tpu.matmul %0, %1, %cst {dimension_numbers = #tpu.dot_dimension_numbers<[1], [0], [0], [1], [0, 0, 1, 1], [], []>} : vector<8x3xf32>, vector<3x256xf32>, vector<8x256xf32> -> vector<8x256xf32>
    %c0_3 = arith.constant 0 : index
    %c0_4 = arith.constant 0 : index
    %3 = vector.load %arg3[%c0_3, %c0_4] : memref<1x256xf32, #tpu.memory_space<vmem>>, vector<1x256xf32>
    %4 = vector.broadcast %3 : vector<1x256xf32> to vector<8x256xf32>
    %5 = arith.addf %2, %4 : vector<8x256xf32>
    %c0_5 = arith.constant 0 : index
    %c0_6 = arith.constant 0 : index
    %6 = vector.load %arg4[%c0_5, %c0_6] : memref<8x256xf32, #tpu.memory_space<vmem>>, vector<8x256xf32>
    tpu.vector_store %arg4[%c0_5, %c0_6], %5 {strides = array<i32>} : memref<8x256xf32, #tpu.memory_space<vmem>>, vector<8x256xf32>,
    return
  }
  func.func @transform_0(%arg0: i32) -> (i32, i32) {
    %c0_i32 = arith.constant 0 : i32
    %c0_i32_0 = arith.constant 0 : i32
    return %arg0, %c0_i32 : i32, i32
  }
  func.func @transform_1(%arg0: i32) -> (i32, i32) {
    %c0_i32 = arith.constant 0 : i32
    %c0_i32_0 = arith.constant 0 : i32
    %c0_i32_1 = arith.constant 0 : i32
    return %c0_i32, %c0_i32_0 : i32, i32
  }
  func.func @transform_2(%arg0: i32) -> (i32, i32) {
    %c0_i32 = arith.constant 0 : i32
    %c0_i32_0 = arith.constant 0 : i32
    %c0_i32_1 = arith.constant 0 : i32
    return %c0_i32, %c0_i32_0 : i32, i32
  }
  func.func @transform_3(%arg0: i32) -> (i32, i32) {
    %c0_i32 = arith.constant 0 : i32
    %c0_i32_0 = arith.constant 0 : i32
    return %arg0, %c0_i32 : i32, i32
  }
}

</mosaic_0001>

<llo_original>
// kernel: position2embedding_pallas.1
$region0: #{position2embedding_pallas.1}
  #allocation0 [shape = 'u32[]', space=smem, size = 0x4, offset = 0x4, fixed_abs, tag = 'smem constant byte address 0x4 - core index']
  #allocation1 [shape = 'u32[72,128]{1,0:T(1,128)}', space=vmem, size = 0x9000, scoped, tag = 'internal scratch']
  %s0 = inlined_call_operand.vmem [shape: f32[16,3], index: 0, kind: input, shape index: {}]
  %s1 = inlined_call_operand.vmem [shape: f32[3,256], index: 1, kind: input, shape index: {}]
  %s2 = inlined_call_operand.vmem [shape: f32[1,256], index: 2, kind: input, shape index: {}]
  %s3 = inlined_call_operand.hbm [shape: f32[16,256], index: 3, kind: output, shape index: {}]
  %s4 = sld [smem:[#allocation0]]
  $region45: #{position2embedding_pallas.1} parent=0
    _
  %s6 = ssub.s32 1, %s4
  %s7 = scalar_select 0, %s6, %s4
  $region1: #{position2embedding_pallas.1} parent=0
    #allocation2 [shape = 'u8[16384]{0}', space=vmem, size = 0x4000, scoped, tag = 'output window, operand 0']
    #allocation3 [shape = 's32[2]{0}', space=sflag, size = 0x8, scoped, tag = 'scoped memory for position2embedding_pallas.1']
    %8 = vsyncpa [#allocation3], 0
    %s9 = scalar_lea.sflag [#allocation3], 1
    %10 = vsyncpa %s9, 0
    loop: start=0, step=1, limit=4
    $region2: #{position2embedding_pallas.1} parent=1 // loop_pre_header
      _
    $region3: #{position2embedding_pallas.1} parent=1 // loop_header
      %s12 = sphi 0, %s16
      %p13 = scmp.ge.s32.totalorder %s12, 4
      %s22 = sphi 0, %s24
      %s25 = sphi 0, %s22
      %s26 = sphi 0, %s25
      %s42 = sphi 0, %s26
      %s46 = sphi 0, %s46
      %s48 = sphi 0, %s46
      %s49 = sphi 0, %s48
      %s63 = sphi 0, %s49
      %s67 = sphi 0, %s67
      %s69 = sphi 0, %s67
      %s70 = sphi 0, %s69
      %s84 = sphi 0, %s70
      %s90 = sphi 0, %s92
      %s93 = sphi 0, %s90
      %s94 = sphi 0, %s93
      %s110 = sphi 0, %s94
    $region4: #{position2embedding_pallas.1} parent=1 // loop_header_branch
      %15 = sbr.rel (%p13) target = $region8
    $region5: #{position2embedding_pallas.1} parent=1 // loop_body
      %s17 = ssub.s32 %s12, 1
      %s18 = ssub.s32 %s12, 2
      %s19 = sadd.s32 %s12, 1
      %s20 = ssub.s32 %s12, %s19
      %p21 = scmp.eq.s32.totalorder %s20, 0
      %s23 = sadd.s32 %s22, 1
      %s24 = scalar_select %p21, %s22, %s23
      %p27 = pneg %p21
      %p28 = scmp.eq.s32.totalorder %s12, 1
      %p29 = por %p27, %p28
      %p30 = scmp.ne.s32.totalorder %s22, %s25
      %p31 = scmp.eq.s32.totalorder %s12, 0
      %p32 = por %p30, %p31
      %p33 = scmp.ne.s32.totalorder %s22, %s25
      %p34 = scmp.eq.s32.totalorder %s17, 1
      %p35 = por %p33, %p34
      %p36 = scmp.ne.s32.totalorder %s25, %s26
      %p37 = scmp.eq.s32.totalorder %s17, 0
      %p38 = por %p36, %p37
      %p39 = scmp.ne.s32.totalorder %s25, %s26
      %p40 = scmp.eq.s32.totalorder %s18, 1
      %p41 = por %p39, %p40
      %p43 = scmp.ne.s32.totalorder %s26, %s42
      %p44 = scmp.eq.s32.totalorder %s18, 0
      %p45 = por %p43, %p44
      %s47 = sadd.s32 %s46, 1
      %p50 = scmp.eq.s32.totalorder %s12, 1
      %p51 = scmp.ne.s32.totalorder %s46, %s48
      %p52 = scmp.eq.s32.totalorder %s12, 0
      %p53 = por %p51, %p52
      %p54 = scmp.ne.s32.totalorder %s46, %s48
      %p55 = scmp.eq.s32.totalorder %s17, 1
      %p56 = por %p54, %p55
      %p57 = scmp.ne.s32.totalorder %s48, %s49
      %p58 = scmp.eq.s32.totalorder %s17, 0
      %p59 = por %p57, %p58
      %p60 = scmp.ne.s32.totalorder %s48, %s49
      %p61 = scmp.eq.s32.totalorder %s18, 1
      %p62 = por %p60, %p61
      %p64 = scmp.ne.s32.totalorder %s49, %s63
      %p65 = scmp.eq.s32.totalorder %s18, 0
      %p66 = por %p64, %p65
      %s68 = sadd.s32 %s67, 1
      %p71 = scmp.eq.s32.totalorder %s12, 1
      %p72 = scmp.ne.s32.totalorder %s67, %s69
      %p73 = scmp.eq.s32.totalorder %s12, 0
      %p74 = por %p72, %p73
      %p75 = scmp.ne.s32.totalorder %s67, %s69
      %p76 = scmp.eq.s32.totalorder %s17, 1
      %p77 = por %p75, %p76
      %p78 = scmp.ne.s32.totalorder %s69, %s70
      %p79 = scmp.eq.s32.totalorder %s17, 0
      %p80 = por %p78, %p79
      %p81 = scmp.ne.s32.totalorder %s69, %s70
      %p82 = scmp.eq.s32.totalorder %s18, 1
      %p83 = por %p81, %p82
      %p85 = scmp.ne.s32.totalorder %s70, %s84
      %p86 = scmp.eq.s32.totalorder %s18, 0
      %p87 = por %p85, %p86
      %s88 = ssub.s32 %s12, %s19
      %p89 = scmp.eq.s32.totalorder %s88, 0
      %s91 = sadd.s32 %s90, 1
      %s92 = scalar_select %p89, %s90, %s91
      %p95 = pneg %p89
      %p96 = scmp.eq.s32.totalorder %s12, 1
      %p97 = por %p95, %p96
      %p98 = scmp.ne.s32.totalorder %s90, %s93
      %p99 = scmp.eq.s32.totalorder %s12, 0
      %p100 = por %p98, %p99
      %p101 = scmp.ne.s32.totalorder %s90, %s93
      %p102 = scmp.eq.s32.totalorder %s17, 1
      %p103 = por %p101, %p102
      %p104 = scmp.ne.s32.totalorder %s93, %s94
      %p105 = scmp.eq.s32.totalorder %s17, 0
      %p106 = por %p104, %p105
      %p107 = scmp.ne.s32.totalorder %s93, %s94
      %p108 = scmp.eq.s32.totalorder %s18, 1
      %p109 = por %p107, %p108
      %p111 = scmp.ne.s32.totalorder %s94, %s110
      %p112 = scmp.eq.s32.totalorder %s18, 0
      %p113 = por %p111, %p112
      %p114 = scmp.le.s32.totalorder 1, %s12
      %p115 = scmp.lt.s32.totalorder %s12, 3
      %p116 = pnand %p114, %p115
      %p117 = pneg %p116
      // Predicated region
      $region9: #{position2embedding_pallas.1} parent=5 // pred_check
        _
      $region10: #{position2embedding_pallas.1} parent=5 // pred_check_branch
        %119 = sbr.rel (%p116) target = $region12
      $region11: #{position2embedding_pallas.1} parent=5 // pred_region
        %s120 = ssub.s32 %s12, 1
        // Predicated region
        $region13: #{position2embedding_pallas.1} parent=11 // pred_check
          %p121 = pneg %p59
        $region14: #{position2embedding_pallas.1} parent=11 // pred_check_branch
          %123 = sbr.rel (%p121) target = $region16
        $region15: #{position2embedding_pallas.1} parent=11 // pred_region
          _
        $region16: #{position2embedding_pallas.1} parent=11 // pred_fallthru
          _
        // Predicated region
        $region17: #{position2embedding_pallas.1} parent=11 // pred_check
          %p124 = pneg %p80
        $region18: #{position2embedding_pallas.1} parent=11 // pred_check_branch
          %126 = sbr.rel (%p124) target = $region20
        $region19: #{position2embedding_pallas.1} parent=11 // pred_region
          _
        $region20: #{position2embedding_pallas.1} parent=11 // pred_fallthru
          _
      $region12: #{position2embedding_pallas.1} parent=5 // pred_fallthru
        _
      %p127 = scmp.lt.s32.totalorder %s12, 2
      // Predicated region
      $region21: #{position2embedding_pallas.1} parent=5 // pred_check
        %p128 = pneg %p127
      $region22: #{position2embedding_pallas.1} parent=5 // pred_check_branch
        %130 = sbr.rel (%p128) target = $region24
      $region23: #{position2embedding_pallas.1} parent=5 // pred_region
        // Predicated region
        $region25: #{position2embedding_pallas.1} parent=23 // pred_check
          %p131 = pneg %p32
        $region26: #{position2embedding_pallas.1} parent=23 // pred_check_branch
          %133 = sbr.rel (%p131) target = $region28
        $region27: #{position2embedding_pallas.1} parent=23 // pred_region
          %p134 = scmp.lt.s32.totalorder %s12, 1
          %s135 = scalar_select %p134, %s12, 1
          %s136 = smul.addr %s135, 8
          %s137 = scalar_lea.vmem %s0, %s136
        $region28: #{position2embedding_pallas.1} parent=23 // pred_fallthru
          _
      $region24: #{position2embedding_pallas.1} parent=5 // pred_fallthru
        _
      %p138 = scmp.le.s32.totalorder 1, %s12
      %p139 = scmp.lt.s32.totalorder %s12, 3
      %p140 = pnand %p138, %p139
      %p141 = pneg %p140
      // Predicated region
      $region29: #{position2embedding_pallas.1} parent=5 // pred_check
        _
      $region30: #{position2embedding_pallas.1} parent=5 // pred_check_branch
        %143 = sbr.rel (%p140) target = $region32
      $region31: #{position2embedding_pallas.1} parent=5 // pred_region
        %s144 = ssub.s32 %s12, 1
        %p145 = scmp.lt.s32.totalorder %s17, 1
        %s146 = scalar_select %p145, %s17, 1
        %s147 = smul.addr %s146, 8
        %s148 = scalar_lea.vmem %s0, %s147
        %p149 = pneg %p38
        %p150 = pneg %p35
        %p151 = pneg %p59
        %p152 = pneg %p56
        %p153 = pneg %p80
        %p154 = pneg %p77
        %p155 = pneg %p106
        %p156 = pneg %p103
        %s157 = sand.u32 %s93, 1
        %s158 = scalar_lea.sflag [#allocation3], %s157
        %s159 = sand.u32 %s93, 1
        %s160 = smul.addr %s159, 16
        %s161 = scalar_lea.vmem [#allocation2], %s160
        %p162 = scmp.lt.s32.totalorder %s17, 1
        %s163 = scalar_select %p162, %s17, 1
        %s164 = smul.addr %s163, 8
        %s165 = scalar_lea.vmem %s0, %s164
        %v166 = vld [vmem:[%s165] sm:$0xff]
        %v167 = vld [vmem:[%s1] sm:$0x77]
        %v168 = vld [vmem:[%s2] sm:$0x3]
        %v170 = vperm.slane %v168, 0
        %v171 = vperm.slane %v168, 1
        %175 = vst [vmem:[#allocation1] ss:$2 sm:$0xff] %v167
        %v176 = vld.sshfl [vmem:[#allocation1] sm:$0xff pattern:$0x75316420]
        %v177 = vld.sshfl [vmem:[#allocation1 + $0x8] sm:$0xff pattern:$0x75316420]
        %vm178 = vcmask 23552
        %v180 = vsel %vm178, %v166, 0
        %vm182 = vcmask 1042432
        %v183 = vsel %vm182, %v176, 0
        %v185 = vsel %vm182, %v177, 0
        %187 = vmatpush.msra.mxu0 0.0
        %188 = vmatpush.msra.mxu0 0.0
        %189 = vmatpush.msra.mxu0 0.0
        %190 = vmatpush.msra.mxu0 0.0
        %191 = vmatpush.msra.mxu0 0.0
        %192 = vmatpush.msra.mxu0 0.0
        %193 = vmatpush.msra.mxu0 0.0
        %194 = vmatpush.msra.mxu0 0.0
        %195 = vmatpush.msra.mxu0 0.0
        %196 = vmatpush.msra.mxu0 0.0
        %197 = vmatpush.msra.mxu0 0.0
        %198 = vmatpush.msra.mxu0 0.0
        %199 = vmatpush.msra.mxu0 0.0
        %200 = vmatpush.msra.mxu0 0.0
        %201 = vmatpush.msra.mxu0 0.0
        %202 = vmatpush.msra.mxu0 %v183
        %203 = vmatmul.f32.gmra.mxu0 %v180
        %v204 = vpop.f32.mrf.mxu0
        %v205 = vadd.f32 %v170, %v204
        %206 = vdwg.mxu0
        %207 = vmatpush.msra.mxu0 0.0
        %208 = vmatpush.msra.mxu0 0.0
        %209 = vmatpush.msra.mxu0 0.0
        %210 = vmatpush.msra.mxu0 0.0
        %211 = vmatpush.msra.mxu0 0.0
        %212 = vmatpush.msra.mxu0 0.0
        %213 = vmatpush.msra.mxu0 0.0
        %214 = vmatpush.msra.mxu0 0.0
        %215 = vmatpush.msra.mxu0 0.0
        %216 = vmatpush.msra.mxu0 0.0
        %217 = vmatpush.msra.mxu0 0.0
        %218 = vmatpush.msra.mxu0 0.0
        %219 = vmatpush.msra.mxu0 0.0
        %220 = vmatpush.msra.mxu0 0.0
        %221 = vmatpush.msra.mxu0 0.0
        %222 = vmatpush.msra.mxu0 %v185
        %223 = vmatmul.f32.gmra.mxu0 %v180
        %v224 = vpop.f32.mrf.mxu0
        %v225 = vadd.f32 %v171, %v224
        %226 = vdwg.mxu0
        %227 = vst [vmem:[%s161] sm:$0xff] %v205
        %228 = vst [vmem:[%s161 + $0x8] sm:$0xff] %v225
        %s229 = sand.u32 %s93, 1
        %s230 = scalar_lea.sflag [#allocation3], %s229
        %s231 = sand.u32 %s93, 1
        %s232 = smul.addr %s231, 16
        %s233 = scalar_lea.vmem [#allocation2], %s232
        // Predicated region
        $region33: #{position2embedding_pallas.1} parent=31 // pred_check
          %p234 = pneg %p103
        $region34: #{position2embedding_pallas.1} parent=31 // pred_check_branch
          %236 = sbr.rel (%p234) target = $region36
        $region35: #{position2embedding_pallas.1} parent=31 // pred_region
          %238 = vsyncadd %s230, 0
          %s239 = smul.addr %s17, 2
          %s240 = smul.addr %s239, 8
          %s241 = scalar_lea.hbm %s3, %s240
          %s243 = sshll.u32 %s233, 4
          %s244 = int_to_ptr.vmem [resolvable:$true] %s243
          %s245 = sshll.u32 %s241, 4
          %s246 = int_to_ptr.hbm [resolvable:$true] %s245
          %248 = dma.vmem_to_hbm [thread:$0]  %s244, 256, %s246, %s230
        $region36: #{position2embedding_pallas.1} parent=31 // pred_fallthru
          _
      $region32: #{position2embedding_pallas.1} parent=5 // pred_fallthru
        _
      %p249 = scmp.le.s32.totalorder 2, %s12
      // Predicated region
      $region37: #{position2embedding_pallas.1} parent=5 // pred_check
        %p250 = pneg %p249
      $region38: #{position2embedding_pallas.1} parent=5 // pred_check_branch
        %252 = sbr.rel (%p250) target = $region40
      $region39: #{position2embedding_pallas.1} parent=5 // pred_region
        %s253 = ssub.s32 %s12, 2
        // Predicated region
        $region41: #{position2embedding_pallas.1} parent=39 // pred_check
          %p254 = pneg %p109
        $region42: #{position2embedding_pallas.1} parent=39 // pred_check_branch
          %256 = sbr.rel (%p254) target = $region44
        $region43: #{position2embedding_pallas.1} parent=39 // pred_region
          %s257 = sand.u32 %s94, 1
          %s258 = scalar_lea.sflag [#allocation3], %s257
          %s259 = sand.u32 %s94, 1
          %s260 = smul.addr %s259, 16
          %s261 = scalar_lea.vmem [#allocation2], %s260
          %263 = dma.done %s258, 256
        $region44: #{position2embedding_pallas.1} parent=39 // pred_fallthru
          _
      $region40: #{position2embedding_pallas.1} parent=5 // pred_fallthru
        _
    $region6: #{position2embedding_pallas.1} parent=1 // loop_footer
      %s16 = sadd.s32 1, %s12
    $region7: #{position2embedding_pallas.1} parent=1 // loop_footer_branch
      %11 = sbr.rel target = $region3
    $region8: #{position2embedding_pallas.1} parent=1 // loop_exit
      _
    %264 = vsyncpa [#allocation3], 1
    %s265 = scalar_lea.sflag [#allocation3], 1
    %266 = vsyncpa %s265, 1

</llo_original>
